<compile_context>
chip_gen: v7x
topology: tpu7x:2x2x1
jax: 0.10.0
libtpu: 0.0.40
codegen_flags: <defaults>
</compile_context>

<pallas_src>
import functools

import jax
import jax.numpy as jnp
from jax import lax
from jax.experimental import pallas as pl
from jax.experimental.pallas import tpu as pltpu

# Module defaults
GAMMA = 2.0
SMOOTH_NR = 1e-5
SMOOTH_DR = 1e-5
LAMBDA_DICE = 1.0
LAMBDA_FOCAL = 1.0


def _dice_focal_kernel(x_ref, t_ref, inter_ref, denom_ref, foc_ref,
                       acc_i, acc_d, acc_f,
                       *, k_steps, n_tiles, last_cols, has_overhang):
    par = pl.program_id(0)   # parallel spatial block (megacore axis)
    k = pl.program_id(1)     # reduction axis (spatial tiles within this block)
    tile_idx = par * k_steps + k

    # Upcast after the (possibly bf16) load; all math/accumulation in f32.
    x = x_ref[...].astype(jnp.float32)   # (rows, tile_s)
    t = t_ref[...].astype(jnp.float32)

    xt = x * t
    # Stable BCE-with-logits: max(x,0) - x*t + log1p(exp(-|x|)).
    e = jnp.exp(-jnp.abs(x))
    bce = jnp.maximum(x, 0.0) - xt + jnp.log1p(e)
    # sigmoid(x) = 0.5*(tanh(0.5*x)+1): no divide, no cmp/select (3 VALU + 1 EUP).
    prob = 0.5 * jnp.tanh(0.5 * x) + 0.5
    one_minus_pt = prob + t - 2.0 * prob * t          # 1 - p_t (soft-target safe)
    focal = (one_minus_pt * one_minus_pt) * bce       # gamma == 2.0 -> VPU square
    sum_xt = x + t                                    # fused sum(x)+sum(t) term

    @pl.when(k == 0)
    def _init():
        acc_i[...] = jnp.zeros_like(acc_i)
        acc_d[...] = jnp.zeros_like(acc_d)
        acc_f[...] = jnp.zeros_like(acc_f)

    def acc_full():
        acc_i[...] += xt
        acc_d[...] += sum_xt
        acc_f[...] += focal

    def acc_masked():
        # Per-tile int32 column index (no global column -> no int32 overflow).
        col = lax.broadcasted_iota(jnp.int32, x.shape, 1)
        valid = col < last_cols
        acc_i[...] += jnp.where(valid, xt, 0.0)
        acc_d[...] += jnp.where(valid, sum_xt, 0.0)
        acc_f[...] += jnp.where(valid, focal, 0.0)

    if last_cols is None and not has_overhang:
        acc_full()                                     # pure fast path
    elif last_cols is None:                            # overhang tile only
        pl.when(tile_idx < n_tiles)(acc_full)
    elif not has_overhang:                             # partial last tile only
        if n_tiles > 1:
            pl.when(tile_idx != n_tiles - 1)(acc_full)
        pl.when(tile_idx == n_tiles - 1)(acc_masked)
    else:                                              # both
        pl.when(tile_idx < n_tiles - 1)(acc_full)
        pl.when(tile_idx == n_tiles - 1)(acc_masked)

    # One-time lane reduce per parallel block; only (rows, 1) x3 hits HBM.
    @pl.when(k == k_steps - 1)
    def _finalize():
        inter_ref[...] = jnp.sum(acc_i[...], axis=-1, keepdims=True)
        denom_ref[...] = jnp.sum(acc_d[...], axis=-1, keepdims=True)
        foc_ref[...] = jnp.sum(acc_f[...], axis=-1, keepdims=True)


def _round_up(a, b):
    return ((a + b - 1) // b) * b


def dice_focal_loss_3d(pred, target, *, max_tile_s=None, input_buffers=2):
    """pred, target: (N, C, D, H, W) logits / one-hot targets. Returns scalar f32."""
    N, C, D, H, W = pred.shape
    assert target.shape == pred.shape
    S = D * H * W
    NC = N * C

    # ---- sublane fold: fill f32 vreg sublane groups when NC is small ----------
    r = 1
    if NC < 8:
        for cand in range(8 // NC, 0, -1):
            if S % cand == 0:
                r = cand
                break
    rows = NC * r
    Sp = S // r

    # No wrapper-side dtype widening: stream the HBM dtype, upcast in-kernel.
    x2 = pred.reshape(rows, Sp)
    t2 = target.reshape(rows, Sp)

    # ---- per-generation VMEM budget & tile size --------------------------------
    try:
        phys_vmem = int(pltpu.get_tpu_info().vmem_capacity_bytes)
    except Exception:
        phys_vmem = 64 * 1024 * 1024          # conservative: v7x per-TC VMEM
    budget = min(phys_vmem // 2, 48 * 1024 * 1024)
    cap = 32768 if phys_vmem >= (96 << 20) else 16384   # v5e/v6e vs v7x
    if max_tile_s is not None:
        cap = min(cap, max_tile_s)

    n_buf = max(2, int(input_buffers))
    # inputs: n_buf pipeline buffers each; accumulators: single-buffered scratch.
    per_col = rows * (n_buf * (x2.dtype.itemsize + t2.dtype.itemsize) + 3 * 4)
    tile_s = (budget // max(per_col, 1)) // 512 * 512
    tile_s = max(128, min(tile_s, cap, _round_up(Sp, 128)))
    tile_s = _round_up(tile_s, 128)

    n_tiles = pl.cdiv(Sp, tile_s)
    # Always feed both v7x TensorCores when there is more than one tile
    # (neutral on single-TC v5e/v6e).  Odd tile counts: clamp + skip overhang.
    P = 2 if n_tiles >= 2 else 1
    K = pl.cdiv(n_tiles, P)
    has_overhang = (P * K) != n_tiles
    last_cols = Sp - (n_tiles - 1) * tile_s
    if last_cols == tile_s:
        last_cols = None                      # no partial last tile -> no mask

    footprint = per_col * tile_s + (1 << 20)
    vmem_limit = int(min(phys_vmem - (4 << 20),
                         max(32 << 20, footprint + (8 << 20))))

    kernel = functools.partial(_dice_focal_kernel, k_steps=K, n_tiles=n_tiles,
                               last_cols=last_cols, has_overhang=has_overhang)

    if has_overhang:
        in_index = lambda par, k: (0, jnp.minimum(par * K + k, n_tiles - 1))
    else:
        in_index = lambda par, k: (0, par * K + k)

    if n_buf != 2:
        # Optional deeper input pipeline (sweepable knob; default path unchanged).
        in_spec = pl.BlockSpec((rows, tile_s), in_index,
                               pipeline_mode=pl.Buffered(n_buf))
    else:
        in_spec = pl.BlockSpec((rows, tile_s), in_index)

    out_shape = tuple(jax.ShapeDtypeStruct((P, rows, 1), jnp.float32)
                      for _ in range(3))
    out_spec = pl.BlockSpec((None, rows, 1), lambda par, k: (par, 0, 0))

    inter_p, denom_p, foc_p = pl.pallas_call(
        kernel,
        out_shape=out_shape,
        grid_spec=pltpu.PrefetchScalarGridSpec(
            num_scalar_prefetch=0,
            grid=(P, K),
            in_specs=[in_spec, in_spec],
            out_specs=(out_spec, out_spec, out_spec),
            scratch_shapes=[pltpu.VMEM((rows, tile_s), jnp.float32),
                            pltpu.VMEM((rows, tile_s), jnp.float32),
                            pltpu.VMEM((rows, tile_s), jnp.float32)],
        ),
        compiler_params=pltpu.CompilerParams(
            dimension_semantics=("parallel", "arbitrary"),
            vmem_limit_bytes=vmem_limit),
    )(x2, t2)

    # ---- tiny finalize in plain JAX (O(P * rows)) -------------------------------
    inter = jnp.sum(inter_p, axis=(0, 2)).reshape(NC, r).sum(axis=1)   # sum(x*t)
    denom = jnp.sum(denom_p, axis=(0, 2)).reshape(NC, r).sum(axis=1)   # sum(x)+sum(t)
    focal_total = jnp.sum(foc_p)

    dice = 1.0 - (2.0 * inter + SMOOTH_NR) / (denom + SMOOTH_DR)
    dice_mean = jnp.mean(dice)
    focal_mean = focal_total / jnp.float32(NC * S)
    return LAMBDA_DICE * dice_mean + LAMBDA_FOCAL * focal_mean


def _reference_loss(pred, target):
    x = pred.astype(jnp.float32)
    t = target.astype(jnp.float32)
    axes = (2, 3, 4)
    inter = jnp.sum(x * t, axis=axes)
    go = jnp.sum(t, axis=axes)
    po = jnp.sum(x, axis=axes)
    dice = 1.0 - (2.0 * inter + SMOOTH_NR) / (go + po + SMOOTH_DR)
    dice_mean = jnp.mean(dice)
    bce = jnp.maximum(x, 0.0) - x * t + jnp.log1p(jnp.exp(-jnp.abs(x)))
    prob = jax.nn.sigmoid(x)
    p_t = prob * t + (1.0 - prob) * (1.0 - t)
    focal_mean = jnp.mean(((1.0 - p_t) ** GAMMA) * bce)
    return LAMBDA_DICE * dice_mean + LAMBDA_FOCAL * focal_mean


if __name__ == "__main__":
    key = jax.random.PRNGKey(0)
    # Case 1: single partial (masked) tile, P=1.
    # Case 2: multi-tile, even tile count, P=2 parallel split, unmasked fast path.
    # Case 3: sublane fold (r=2), odd tile count -> clamped overhang tile + masked last tile.
    # Case 4: bf16 logit streaming with rows not a multiple of 8.
    cases = [
        ((2, 4, 5, 7, 9), None, jnp.float32),
        ((2, 4, 16, 16, 32), 2048, jnp.float32),
        ((1, 4, 8, 16, 17), 512, jnp.float32),
        ((2, 3, 8, 8, 12), None, jnp.bfloat16),
    ]
    for i, (shape, mts, pdt) in enumerate(cases):
        N, C, D, H, W = shape
        k1, k2 = jax.random.split(jax.random.fold_in(key, i))
        pred = jax.random.normal(k1, shape, dtype=jnp.float32).astype(pdt)
        labels = jax.random.randint(k2, (N, D, H, W), 0, C)
        target = jax.nn.one_hot(labels, C, axis=1, dtype=jnp.float32)

        loss = jax.block_until_ready(dice_focal_loss_3d(pred, target, max_tile_s=mts))
        ref = jax.block_until_ready(_reference_loss(pred, target))
        assert jnp.allclose(loss, ref, rtol=1e-4, atol=1e-6), (i, loss, ref)

    print("KERNEL_OK")
</pallas_src>

<mosaic_0001>
module attributes {stable_mosaic.version = 11 : i64} {
  func.func @_dice_focal_kernel(%arg0: i32, %arg1: i32, %arg2: memref<8x384xf32, #tpu.memory_space<vmem>>, %arg3: memref<8x384xf32, #tpu.memory_space<vmem>>, %arg4: memref<1x8x1xf32, #tpu.memory_space<vmem>>, %arg5: memref<1x8x1xf32, #tpu.memory_space<vmem>>, %arg6: memref<1x8x1xf32, #tpu.memory_space<vmem>>, %arg7: memref<8x384xf32, #tpu.memory_space<vmem>>, %arg8: memref<8x384xf32, #tpu.memory_space<vmem>>, %arg9: memref<8x384xf32, #tpu.memory_space<vmem>>) attributes {dimension_semantics = [#tpu.dimension_semantics<parallel>, #tpu.dimension_semantics<arbitrary>], iteration_bounds = array<i64: 1, 1>, scalar_prefetch = 0 : i64, scratch_operands = 3 : i64, tpu.core_type = #tpu.core_type<tc>, window_params = [{transform_indices = @transform_0, window_bounds = array<i64: 8, 384>}, {transform_indices = @transform_1, window_bounds = array<i64: 8, 384>}, {transform_indices = @transform_2, window_bounds = array<i64: 1, 8, 1>}, {transform_indices = @transform_3, window_bounds = array<i64: 1, 8, 1>}, {transform_indices = @transform_4, window_bounds = array<i64: 1, 8, 1>}]} {
    %c1_i32 = arith.constant 1 : i32
    %0 = arith.muli %arg0, %c1_i32 : i32
    %1 = arith.addi %0, %arg1 : i32
    %c0 = arith.constant 0 : index
    %c0_0 = arith.constant 0 : index
    %2 = vector.load %arg2[%c0, %c0_0] : memref<8x384xf32, #tpu.memory_space<vmem>>, vector<8x384xf32>
    %c0_1 = arith.constant 0 : index
    %c0_2 = arith.constant 0 : index
    %3 = vector.load %arg3[%c0_1, %c0_2] : memref<8x384xf32, #tpu.memory_space<vmem>>, vector<8x384xf32>
    %4 = arith.mulf %2, %3 : vector<8x384xf32>
    %5 = math.absf %2 : vector<8x384xf32>
    %cst = arith.constant 0.000000e+00 : f32
    %6 = vector.broadcast %cst : f32 to vector<8x384xf32>
    %7 = arith.subf %6, %5 : vector<8x384xf32>
    %8 = math.exp %7 : vector<8x384xf32>
    %cst_3 = arith.constant 0.000000e+00 : f32
    %9 = vector.broadcast %cst_3 : f32 to vector<8x384xf32>
    %10 = arith.maximumf %2, %9 : vector<8x384xf32>
    %11 = arith.subf %10, %4 : vector<8x384xf32>
    %12 = math.log1p %8 : vector<8x384xf32>
    %13 = arith.addf %11, %12 : vector<8x384xf32>
    %cst_4 = arith.constant 5.000000e-01 : f32
    %14 = vector.broadcast %cst_4 : f32 to vector<8x384xf32>
    %15 = arith.mulf %14, %2 : vector<8x384xf32>
    %16 = math.tanh %15 : vector<8x384xf32>
    %cst_5 = arith.constant 5.000000e-01 : f32
    %17 = vector.broadcast %cst_5 : f32 to vector<8x384xf32>
    %18 = arith.mulf %17, %16 : vector<8x384xf32>
    %cst_6 = arith.constant 5.000000e-01 : f32
    %19 = vector.broadcast %cst_6 : f32 to vector<8x384xf32>
    %20 = arith.addf %18, %19 : vector<8x384xf32>
    %21 = arith.addf %20, %3 : vector<8x384xf32>
    %cst_7 = arith.constant 2.000000e+00 : f32
    %22 = vector.broadcast %cst_7 : f32 to vector<8x384xf32>
    %23 = arith.mulf %22, %20 : vector<8x384xf32>
    %24 = arith.mulf %23, %3 : vector<8x384xf32>
    %25 = arith.subf %21, %24 : vector<8x384xf32>
    %26 = arith.mulf %25, %25 : vector<8x384xf32>
    %27 = arith.mulf %26, %13 : vector<8x384xf32>
    %28 = arith.addf %2, %3 : vector<8x384xf32>
    %c0_i32 = arith.constant 0 : i32
    %29 = arith.cmpi eq, %arg1, %c0_i32 : i32
    %30 = arith.extui %29 : i1 to i32
    %c0_i32_8 = arith.constant 0 : i32
    %31 = arith.cmpi ne, %30, %c0_i32_8 : i32
    scf.if %31 {
      %cst_13 = arith.constant 0.000000e+00 : f32
      %38 = vector.broadcast %cst_13 : f32 to vector<8x384xf32>
      %c0_14 = arith.constant 0 : index
      %c0_15 = arith.constant 0 : index
      %39 = vector.load %arg7[%c0_14, %c0_15] : memref<8x384xf32, #tpu.memory_space<vmem>>, vector<8x384xf32>
      tpu.vector_store %arg7[%c0_14, %c0_15], %38 {strides = array<i32>} : memref<8x384xf32, #tpu.memory_space<vmem>>, vector<8x384xf32>,
      %cst_16 = arith.constant 0.000000e+00 : f32
      %40 = vector.broadcast %cst_16 : f32 to vector<8x384xf32>
      %c0_17 = arith.constant 0 : index
      %c0_18 = arith.constant 0 : index
      %41 = vector.load %arg8[%c0_17, %c0_18] : memref<8x384xf32, #tpu.memory_space<vmem>>, vector<8x384xf32>
      tpu.vector_store %arg8[%c0_17, %c0_18], %40 {strides = array<i32>} : memref<8x384xf32, #tpu.memory_space<vmem>>, vector<8x384xf32>,
      %cst_19 = arith.constant 0.000000e+00 : f32
      %42 = vector.broadcast %cst_19 : f32 to vector<8x384xf32>
      %c0_20 = arith.constant 0 : index
      %c0_21 = arith.constant 0 : index
      %43 = vector.load %arg9[%c0_20, %c0_21] : memref<8x384xf32, #tpu.memory_space<vmem>>, vector<8x384xf32>
      tpu.vector_store %arg9[%c0_20, %c0_21], %42 {strides = array<i32>} : memref<8x384xf32, #tpu.memory_space<vmem>>, vector<8x384xf32>,
    } else {
    }
    %c0_i32_9 = arith.constant 0 : i32
    %32 = arith.cmpi eq, %1, %c0_i32_9 : i32
    %33 = arith.extui %32 : i1 to i32
    %c0_i32_10 = arith.constant 0 : i32
    %34 = arith.cmpi ne, %33, %c0_i32_10 : i32
    scf.if %34 {
      %38 = tpu.iota {dimensions = array<i32: 1>} : vector<8x384xi32>
      %c315_i32 = arith.constant 315 : i32
      %39 = vector.broadcast %c315_i32 : i32 to vector<8x384xi32>
      %40 = arith.cmpi slt, %38, %39 : vector<8x384xi32>
      %c0_13 = arith.constant 0 : index
      %c0_14 = arith.constant 0 : index
      %41 = vector.load %arg7[%c0_13, %c0_14] : memref<8x384xf32, #tpu.memory_space<vmem>>, vector<8x384xf32>
      %cst_15 = arith.constant 0.000000e+00 : f32
      %42 = vector.broadcast %cst_15 : f32 to vector<8x384xf32>
      %43 = arith.select %40, %4, %42 : vector<8x384xi1>, vector<8x384xf32>
      %44 = arith.addf %41, %43 : vector<8x384xf32>
      %c0_16 = arith.constant 0 : index
      %c0_17 = arith.constant 0 : index
      %45 = vector.load %arg7[%c0_16, %c0_17] : memref<8x384xf32, #tpu.memory_space<vmem>>, vector<8x384xf32>
      tpu.vector_store %arg7[%c0_16, %c0_17], %44 {strides = array<i32>} : memref<8x384xf32, #tpu.memory_space<vmem>>, vector<8x384xf32>,
      %c0_18 = arith.constant 0 : index
      %c0_19 = arith.constant 0 : index
      %46 = vector.load %arg8[%c0_18, %c0_19] : memref<8x384xf32, #tpu.memory_space<vmem>>, vector<8x384xf32>
      %cst_20 = arith.constant 0.000000e+00 : f32
      %47 = vector.broadcast %cst_20 : f32 to vector<8x384xf32>
      %48 = arith.select %40, %28, %47 : vector<8x384xi1>, vector<8x384xf32>
      %49 = arith.addf %46, %48 : vector<8x384xf32>
      %c0_21 = arith.constant 0 : index
      %c0_22 = arith.constant 0 : index
      %50 = vector.load %arg8[%c0_21, %c0_22] : memref<8x384xf32, #tpu.memory_space<vmem>>, vector<8x384xf32>
      tpu.vector_store %arg8[%c0_21, %c0_22], %49 {strides = array<i32>} : memref<8x384xf32, #tpu.memory_space<vmem>>, vector<8x384xf32>,
      %c0_23 = arith.constant 0 : index
      %c0_24 = arith.constant 0 : index
      %51 = vector.load %arg9[%c0_23, %c0_24] : memref<8x384xf32, #tpu.memory_space<vmem>>, vector<8x384xf32>
      %cst_25 = arith.constant 0.000000e+00 : f32
      %52 = vector.broadcast %cst_25 : f32 to vector<8x384xf32>
      %53 = arith.select %40, %27, %52 : vector<8x384xi1>, vector<8x384xf32>
      %54 = arith.addf %51, %53 : vector<8x384xf32>
      %c0_26 = arith.constant 0 : index
      %c0_27 = arith.constant 0 : index
      %55 = vector.load %arg9[%c0_26, %c0_27] : memref<8x384xf32, #tpu.memory_space<vmem>>, vector<8x384xf32>
      tpu.vector_store %arg9[%c0_26, %c0_27], %54 {strides = array<i32>} : memref<8x384xf32, #tpu.memory_space<vmem>>, vector<8x384xf32>,
    } else {
    }
    %c0_i32_11 = arith.constant 0 : i32
    %35 = arith.cmpi eq, %arg1, %c0_i32_11 : i32
    %36 = arith.extui %35 : i1 to i32
    %c0_i32_12 = arith.constant 0 : i32
    %37 = arith.cmpi ne, %36, %c0_i32_12 : i32
    scf.if %37 {
      %c0_13 = arith.constant 0 : index
      %c0_14 = arith.constant 0 : index
      %38 = vector.load %arg7[%c0_13, %c0_14] : memref<8x384xf32, #tpu.memory_space<vmem>>, vector<8x384xf32>
      %cst_15 = arith.constant dense<0.000000e+00> : vector<8xf32>
      %39 = vector.multi_reduction <add>, %38, %cst_15 [1] : vector<8x384xf32> to vector<8xf32>
      %40 = vector.shape_cast %39 : vector<8xf32> to vector<8x1xf32>
      %c0_16 = arith.constant 0 : index
      %c0_17 = arith.constant 0 : index
      %c0_18 = arith.constant 0 : index
      %41 = vector.load %arg4[%c0_16, %c0_17, %c0_18] : memref<1x8x1xf32, #tpu.memory_space<vmem>>, vector<1x8x1xf32>
      %42 = vector.shape_cast %41 : vector<1x8x1xf32> to vector<8x1xf32>
      %43 = vector.shape_cast %40 : vector<8x1xf32> to vector<1x8x1xf32>
      tpu.vector_store %arg4[%c0_16, %c0_17, %c0_18], %43 {strides = array<i32>} : memref<1x8x1xf32, #tpu.memory_space<vmem>>, vector<1x8x1xf32>,
      %c0_19 = arith.constant 0 : index
      %c0_20 = arith.constant 0 : index
      %44 = vector.load %arg8[%c0_19, %c0_20] : memref<8x384xf32, #tpu.memory_space<vmem>>, vector<8x384xf32>
      %cst_21 = arith.constant dense<0.000000e+00> : vector<8xf32>
      %45 = vector.multi_reduction <add>, %44, %cst_21 [1] : vector<8x384xf32> to vector<8xf32>
      %46 = vector.shape_cast %45 : vector<8xf32> to vector<8x1xf32>
      %c0_22 = arith.constant 0 : index
      %c0_23 = arith.constant 0 : index
      %c0_24 = arith.constant 0 : index
      %47 = vector.load %arg5[%c0_22, %c0_23, %c0_24] : memref<1x8x1xf32, #tpu.memory_space<vmem>>, vector<1x8x1xf32>
      %48 = vector.shape_cast %47 : vector<1x8x1xf32> to vector<8x1xf32>
      %49 = vector.shape_cast %46 : vector<8x1xf32> to vector<1x8x1xf32>
      tpu.vector_store %arg5[%c0_22, %c0_23, %c0_24], %49 {strides = array<i32>} : memref<1x8x1xf32, #tpu.memory_space<vmem>>, vector<1x8x1xf32>,
      %c0_25 = arith.constant 0 : index
      %c0_26 = arith.constant 0 : index
      %50 = vector.load %arg9[%c0_25, %c0_26] : memref<8x384xf32, #tpu.memory_space<vmem>>, vector<8x384xf32>
      %cst_27 = arith.constant dense<0.000000e+00> : vector<8xf32>
      %51 = vector.multi_reduction <add>, %50, %cst_27 [1] : vector<8x384xf32> to vector<8xf32>
      %52 = vector.shape_cast %51 : vector<8xf32> to vector<8x1xf32>
      %c0_28 = arith.constant 0 : index
      %c0_29 = arith.constant 0 : index
      %c0_30 = arith.constant 0 : index
      %53 = vector.load %arg6[%c0_28, %c0_29, %c0_30] : memref<1x8x1xf32, #tpu.memory_space<vmem>>, vector<1x8x1xf32>
      %54 = vector.shape_cast %53 : vector<1x8x1xf32> to vector<8x1xf32>
      %55 = vector.shape_cast %52 : vector<8x1xf32> to vector<1x8x1xf32>
      tpu.vector_store %arg6[%c0_28, %c0_29, %c0_30], %55 {strides = array<i32>} : memref<1x8x1xf32, #tpu.memory_space<vmem>>, vector<1x8x1xf32>,
    } else {
    }
    return
  }
  func.func @transform_0(%arg0: i32, %arg1: i32) -> (i32, i32) {
    %c1_i32 = arith.constant 1 : i32
    %0 = arith.muli %arg0, %c1_i32 : i32
    %1 = arith.addi %0, %arg1 : i32
    %c0_i32 = arith.constant 0 : i32
    %c0_i32_0 = arith.constant 0 : i32
    return %c0_i32, %1 : i32, i32
  }
  func.func @transform_1(%arg0: i32, %arg1: i32) -> (i32, i32) {
    %c1_i32 = arith.constant 1 : i32
    %0 = arith.muli %arg0, %c1_i32 : i32
    %1 = arith.addi %0, %arg1 : i32
    %c0_i32 = arith.constant 0 : i32
    %c0_i32_0 = arith.constant 0 : i32
    return %c0_i32, %1 : i32, i32
  }
  func.func @transform_2(%arg0: i32, %arg1: i32) -> (i32, i32, i32) {
    %c0_i32 = arith.constant 0 : i32
    %c0_i32_0 = arith.constant 0 : i32
    %c0_i32_1 = arith.constant 0 : i32
    return %arg0, %c0_i32, %c0_i32_0 : i32, i32, i32
  }
  func.func @transform_3(%arg0: i32, %arg1: i32) -> (i32, i32, i32) {
    %c0_i32 = arith.constant 0 : i32
    %c0_i32_0 = arith.constant 0 : i32
    %c0_i32_1 = arith.constant 0 : i32
    return %arg0, %c0_i32, %c0_i32_0 : i32, i32, i32
  }
  func.func @transform_4(%arg0: i32, %arg1: i32) -> (i32, i32, i32) {
    %c0_i32 = arith.constant 0 : i32
    %c0_i32_0 = arith.constant 0 : i32
    %c0_i32_1 = arith.constant 0 : i32
    return %arg0, %c0_i32, %c0_i32_0 : i32, i32, i32
  }
}

</mosaic_0001>

<llo_original>
// kernel: tpu_custom_call.1
$region0: #{tpu_custom_call.1}
  #allocation0 [shape = 'u32[]', space=smem, size = 0x4, offset = 0x4, fixed_abs, tag = 'smem constant byte address 0x4 - core index']
  #allocation1 [shape = 'u32[144,128]{1,0:T(1,128)}', space=vmem, size = 0x12000, scoped, tag = 'internal scratch']
  #allocation2 [shape = 'f32[8,384]{1,0:T(8,128)}', space=vmem, size = 0x3000, scoped, tag = 'scratch operand']
  #allocation3 [shape = 'f32[8,384]{1,0:T(8,128)}', space=vmem, size = 0x3000, scoped, tag = 'scratch operand']
  #allocation4 [shape = 'f32[8,384]{1,0:T(8,128)}', space=vmem, size = 0x3000, scoped, tag = 'scratch operand']
  %s0 = inlined_call_operand.hbm [shape: f32[8,315], index: 0, kind: input, shape index: {}]
  %s1 = inlined_call_operand.hbm [shape: f32[8,315], index: 1, kind: input, shape index: {}]
  %s2 = inlined_call_operand.vmem [shape: f32[1,8,1], index: 2, kind: output, shape index: {0}]
  %s3 = inlined_call_operand.vmem [shape: f32[1,8,1], index: 3, kind: output, shape index: {1}]
  %s4 = inlined_call_operand.vmem [shape: f32[1,8,1], index: 4, kind: output, shape index: {2}]
  %5 = xla_tuple %s2, %s3, %s4
  %s6 = sld [smem:[#allocation0]]
  $region54: #{tpu_custom_call.1} parent=0
    _
  %s8 = ssub.s32 1, %s6
  %s9 = scalar_select 0, %s8, %s6
  $region1: #{tpu_custom_call.1} parent=0
    #allocation5 [shape = 'u8[12288]{0}', space=vmem, size = 0x3000, scoped, tag = 'input window, operand 0, single buffered']
    #allocation6 [shape = 's32[1]{0}', space=sflag, size = 0x4, scoped, tag = 'scoped memory for tpu_custom_call.1']
    #allocation7 [shape = 'u8[12288]{0}', space=vmem, size = 0x3000, scoped, tag = 'input window, operand 1, single buffered']
    #allocation8 [shape = 's32[1]{0}', space=sflag, size = 0x4, scoped, tag = 'scoped memory for tpu_custom_call.1']
    %10 = vsyncpa [#allocation6], 0
    %11 = vsyncpa [#allocation8], 0
    // Predicated region
    $region2: #{tpu_custom_call.1} parent=1 // pred_check
      _
    $region3: #{tpu_custom_call.1} parent=1 // pred_check_branch
      %13 = sbr.rel (0) target = $region5
    $region4: #{tpu_custom_call.1} parent=1 // pred_region
      %s14 = sadd.s32 0, 0
      %s15 = smul.u32 3, %s14
      %s17 = ssub.s32 384, 384
      %18 = vsyncadd [#allocation6], %s17
      %s19 = smul.addr %s15, 128
      %s20 = scalar_lea.hbm %s0, %s19
      %s22 = sshll.u32 [#allocation5], 4
      %s23 = int_to_ptr.vmem [resolvable:$true] %s22
      %25 = dma.hbm_to_vmem [thread:$0]  %s20, 384, %s23, [#allocation6]
    $region5: #{tpu_custom_call.1} parent=1 // pred_fallthru
      _
    // Predicated region
    $region6: #{tpu_custom_call.1} parent=1 // pred_check
      _
    $region7: #{tpu_custom_call.1} parent=1 // pred_check_branch
      %27 = sbr.rel (0) target = $region9
    $region8: #{tpu_custom_call.1} parent=1 // pred_region
      %s28 = sadd.s32 0, 0
      %s29 = smul.u32 3, %s28
      %s31 = ssub.s32 384, 384
      %32 = vsyncadd [#allocation8], %s31
      %s33 = smul.addr %s29, 128
      %s34 = scalar_lea.hbm %s1, %s33
      %s36 = sshll.u32 [#allocation7], 4
      %s37 = int_to_ptr.vmem [resolvable:$true] %s36
      %39 = dma.hbm_to_vmem [thread:$0]  %s34, 384, %s37, [#allocation8]
    $region9: #{tpu_custom_call.1} parent=1 // pred_fallthru
      _
    // Predicated region
    $region10: #{tpu_custom_call.1} parent=1 // pred_check
      _
    $region11: #{tpu_custom_call.1} parent=1 // pred_check_branch
      %41 = sbr.rel (0) target = $region13
    $region12: #{tpu_custom_call.1} parent=1 // pred_region
      %42 = dma.done [#allocation6], 384
    $region13: #{tpu_custom_call.1} parent=1 // pred_fallthru
      _
    // Predicated region
    $region14: #{tpu_custom_call.1} parent=1 // pred_check
      _
    $region15: #{tpu_custom_call.1} parent=1 // pred_check_branch
      %44 = sbr.rel (0) target = $region17
    $region16: #{tpu_custom_call.1} parent=1 // pred_region
      %45 = dma.done [#allocation8], 384
    $region17: #{tpu_custom_call.1} parent=1 // pred_fallthru
      _
    %s46 = sadd.s32 0, 0
    %s47 = smul.u32 3, %s46
    %s48 = sadd.s32 0, 0
    %s49 = smul.u32 3, %s48
    %s50 = sadd.s32 0, 0
    %v51 = vld [vmem:[#allocation5] sm:$0xff]
    %v52 = vld [vmem:[#allocation5 + $0x8] sm:$0xff]
    %v53 = vld [vmem:[#allocation5 + $0x10] sm:$0xff]
    %v54 = vld [vmem:[#allocation7] sm:$0xff]
    %v55 = vld [vmem:[#allocation7 + $0x8] sm:$0xff]
    %v56 = vld [vmem:[#allocation7 + $0x10] sm:$0xff]
    %v57 = vmul.f32 %v51, %v54
    %v58 = vmul.f32 %v52, %v55
    %v59 = vmul.f32 %v53, %v56
    %v60 = vand.u32 2147483647, %v51
    %v61 = vand.u32 2147483647, %v52
    %v62 = vand.u32 2147483647, %v53
    %v63 = vsub.f32 0.0, %v60
    %v64 = vsub.f32 0.0, %v61
    %v65 = vsub.f32 0.0, %v62
    %v66 = vmul.f32 %v63, 1.442695
    %v67 = vpow.pop %v66
    %v68 = vmul.f32 %v64, 1.442695
    %v69 = vpow.pop %v68
    %v70 = vmul.f32 %v65, 1.442695
    %v71 = vpow.pop %v70
    %v72 = vmax.f32 %v51, 0.0
    %v73 = vmax.f32 %v52, 0.0
    %v74 = vmax.f32 %v53, 0.0
    %v75 = vsub.f32 %v72, %v57
    %v76 = vsub.f32 %v73, %v58
    %v77 = vsub.f32 %v74, %v59
    %v78 = vadd.f32 %v67, 1.0
    %v79 = vlog2.pop %v78
    %v80 = vmul.f32 %v79, 0.6931472
    %v81 = vmul.f32 -0.5, %v67
    %v82 = vadd.f32 %v81, 1.0
    %v83 = vmul.f32 %v82, %v67
    %v84 = vand.u32 2147483647, %v67
    %vm85 = vcmp.lt.f32.partialorder %v84, 0.0004427343
    %v86 = vsel %vm85, %v83, %v80
    %v87 = vadd.f32 %v69, 1.0
    %v88 = vlog2.pop %v87
    %v89 = vmul.f32 %v88, 0.6931472
    %v90 = vmul.f32 -0.5, %v69
    %v91 = vadd.f32 %v90, 1.0
    %v92 = vmul.f32 %v91, %v69
    %v93 = vand.u32 2147483647, %v69
    %vm94 = vcmp.lt.f32.partialorder %v93, 0.0004427343
    %v95 = vsel %vm94, %v92, %v89
    %v96 = vadd.f32 %v71, 1.0
    %v97 = vlog2.pop %v96
    %v98 = vmul.f32 %v97, 0.6931472
    %v99 = vmul.f32 -0.5, %v71
    %v100 = vadd.f32 %v99, 1.0
    %v101 = vmul.f32 %v100, %v71
    %v102 = vand.u32 2147483647, %v71
    %vm103 = vcmp.lt.f32.partialorder %v102, 0.0004427343
    %v104 = vsel %vm103, %v101, %v98
    %v105 = vadd.f32 %v75, %v86
    %v106 = vadd.f32 %v76, %v95
    %v107 = vadd.f32 %v77, %v104
    %v108 = vmul.f32 %v51, 0.5
    %v109 = vmul.f32 %v52, 0.5
    %v110 = vmul.f32 %v53, 0.5
    %v111 = vtanh.pop %v108
    %v112 = vtanh.pop %v109
    %v113 = vtanh.pop %v110
    %v114 = vmul.f32 %v111, 0.5
    %v115 = vmul.f32 %v112, 0.5
    %v116 = vmul.f32 %v113, 0.5
    %v117 = vadd.f32 %v114, 0.5
    %v118 = vadd.f32 %v115, 0.5
    %v119 = vadd.f32 %v116, 0.5
    %v120 = vadd.f32 %v117, %v54
    %v121 = vadd.f32 %v118, %v55
    %v122 = vadd.f32 %v119, %v56
    %v123 = vmul.f32 %v117, 2.0
    %v124 = vmul.f32 %v118, 2.0
    %v125 = vmul.f32 %v119, 2.0
    %v126 = vmul.f32 %v123, %v54
    %v127 = vmul.f32 %v124, %v55
    %v128 = vmul.f32 %v125, %v56
    %v129 = vsub.f32 %v120, %v126
    %v130 = vsub.f32 %v121, %v127
    %v131 = vsub.f32 %v122, %v128
    %v132 = vmul.f32 %v129, %v129
    %v133 = vmul.f32 %v130, %v130
    %v134 = vmul.f32 %v131, %v131
    %v135 = vmul.f32 %v132, %v105
    %v136 = vmul.f32 %v133, %v106
    %v137 = vmul.f32 %v134, %v107
    %v138 = vadd.f32 %v51, %v54
    %v139 = vadd.f32 %v52, %v55
    %v140 = vadd.f32 %v53, %v56
    %p141 = scmp.eq.s32.totalorder 0, 0
    // Predicated region
    $region18: #{tpu_custom_call.1} parent=1 // pred_check
      %p142 = pneg %p141
    $region19: #{tpu_custom_call.1} parent=1 // pred_check_branch
      %144 = sbr.rel (%p142) target = $region21
    $region20: #{tpu_custom_call.1} parent=1 // pred_region
      %145 = vst [vmem:[#allocation2] sm:$0xff] 0.0
      %146 = vst [vmem:[#allocation2 + $0x8] sm:$0xff] 0.0
      %147 = vst [vmem:[#allocation2 + $0x10] sm:$0xff] 0.0
      %148 = vst [vmem:[#allocation3] sm:$0xff] 0.0
      %149 = vst [vmem:[#allocation3 + $0x8] sm:$0xff] 0.0
      %150 = vst [vmem:[#allocation3 + $0x10] sm:$0xff] 0.0
      %151 = vst [vmem:[#allocation4] sm:$0xff] 0.0
      %152 = vst [vmem:[#allocation4 + $0x8] sm:$0xff] 0.0
      %153 = vst [vmem:[#allocation4 + $0x10] sm:$0xff] 0.0
    $region21: #{tpu_custom_call.1} parent=1 // pred_fallthru
      _
    %p154 = scmp.eq.s32.totalorder %s50, 0
    // Predicated region
    $region22: #{tpu_custom_call.1} parent=1 // pred_check
      %p155 = pneg %p154
    $region23: #{tpu_custom_call.1} parent=1 // pred_check_branch
      %157 = sbr.rel (%p155) target = $region25
    $region24: #{tpu_custom_call.1} parent=1 // pred_region
      %v158 = vlaneseq
      %v159 = vand.u32 %v158, 127
      %v160 = vadd.s32 %v159, 128
      %v161 = vadd.s32 %v159, 256
      %vm162 = vcmp.lt.s32.totalorder %v159, 315
      %vm163 = vcmp.lt.s32.totalorder %v160, 315
      %vm164 = vcmp.lt.s32.totalorder %v161, 315
      %v165 = vld [vmem:[#allocation2] sm:$0xff]
      %v166 = vld [vmem:[#allocation2 + $0x8] sm:$0xff]
      %v167 = vld [vmem:[#allocation2 + $0x10] sm:$0xff]
      %v168 = vsel %vm162, %v57, 0.0
      %v169 = vsel %vm163, %v58, 0.0
      %v170 = vsel %vm164, %v59, 0.0
      %v171 = vadd.f32 %v165, %v168
      %v172 = vadd.f32 %v166, %v169
      %v173 = vadd.f32 %v167, %v170
      %174 = vst [vmem:[#allocation2] sm:$0xff] %v171
      %175 = vst [vmem:[#allocation2 + $0x8] sm:$0xff] %v172
      %176 = vst [vmem:[#allocation2 + $0x10] sm:$0xff] %v173
      %v177 = vld [vmem:[#allocation3] sm:$0xff]
      %v178 = vld [vmem:[#allocation3 + $0x8] sm:$0xff]
      %v179 = vld [vmem:[#allocation3 + $0x10] sm:$0xff]
      %v180 = vsel %vm162, %v138, 0.0
      %v181 = vsel %vm163, %v139, 0.0
      %v182 = vsel %vm164, %v140, 0.0
      %v183 = vadd.f32 %v177, %v180
      %v184 = vadd.f32 %v178, %v181
      %v185 = vadd.f32 %v179, %v182
      %186 = vst [vmem:[#allocation3] sm:$0xff] %v183
      %187 = vst [vmem:[#allocation3 + $0x8] sm:$0xff] %v184
      %188 = vst [vmem:[#allocation3 + $0x10] sm:$0xff] %v185
      %v189 = vld [vmem:[#allocation4] sm:$0xff]
      %v190 = vld [vmem:[#allocation4 + $0x8] sm:$0xff]
      %v191 = vld [vmem:[#allocation4 + $0x10] sm:$0xff]
      %v192 = vsel %vm162, %v135, 0.0
      %v193 = vsel %vm163, %v136, 0.0
      %v194 = vsel %vm164, %v137, 0.0
      %v195 = vadd.f32 %v189, %v192
      %v196 = vadd.f32 %v190, %v193
      %v197 = vadd.f32 %v191, %v194
      %198 = vst [vmem:[#allocation4] sm:$0xff] %v195
      %199 = vst [vmem:[#allocation4 + $0x8] sm:$0xff] %v196
      %200 = vst [vmem:[#allocation4 + $0x10] sm:$0xff] %v197
    $region25: #{tpu_custom_call.1} parent=1 // pred_fallthru
      _
    // Predicated region
    $region26: #{tpu_custom_call.1} parent=1 // pred_check
      %p201 = pneg %p141
    $region27: #{tpu_custom_call.1} parent=1 // pred_check_branch
      %203 = sbr.rel (%p201) target = $region29
    $region28: #{tpu_custom_call.1} parent=1 // pred_region
      %v204 = vld [vmem:[#allocation2] sm:$0xff]
      %v205 = vld [vmem:[#allocation2 + $0x8] sm:$0xff]
      %v206 = vld [vmem:[#allocation2 + $0x10] sm:$0xff]
      %v207 = vadd.f32 %v204, %v205
      %v208 = vadd.f32 %v207, %v206
      %209 = vadd.xlane.f32.xlu0 %v208
      %v210 = vpop.xlane.xlu0 %209
      %vm211 = vcmask 7168
      %212 = vst.msk [vmem:[%s2] sm:$0xff] %vm211, %v210
      %v213 = vld [vmem:[#allocation3] sm:$0xff]
      %v214 = vld [vmem:[#allocation3 + $0x8] sm:$0xff]
      %v215 = vld [vmem:[#allocation3 + $0x10] sm:$0xff]
      %v216 = vadd.f32 %v213, %v214
      %v217 = vadd.f32 %v216, %v215
      %218 = vadd.xlane.f32.xlu0 %v217
      %v219 = vpop.xlane.xlu0 %218
      %220 = vst.msk [vmem:[%s3] sm:$0xff] %vm211, %v219
      %v221 = vld [vmem:[#allocation4] sm:$0xff]
      %v222 = vld [vmem:[#allocation4 + $0x8] sm:$0xff]
      %v223 = vld [vmem:[#allocation4 + $0x10] sm:$0xff]
      %v224 = vadd.f32 %v221, %v222
      %v225 = vadd.f32 %v224, %v223
      %226 = vadd.xlane.f32.xlu0 %v225
      %v227 = vpop.xlane.xlu0 %226
      %228 = vst.msk [vmem:[%s4] sm:$0xff] %vm211, %v227
    $region29: #{tpu_custom_call.1} parent=1 // pred_fallthru
      _
    // Predicated region
    $region30: #{tpu_custom_call.1} parent=1 // pred_check
      _
    $region31: #{tpu_custom_call.1} parent=1 // pred_check_branch
      %230 = sbr.rel (0) target = $region33
    $region32: #{tpu_custom_call.1} parent=1 // pred_region
      _
    $region33: #{tpu_custom_call.1} parent=1 // pred_fallthru
      _
    // Predicated region
    $region34: #{tpu_custom_call.1} parent=1 // pred_check
      _
    $region35: #{tpu_custom_call.1} parent=1 // pred_check_branch
      %232 = sbr.rel (0) target = $region37
    $region36: #{tpu_custom_call.1} parent=1 // pred_region
      _
    $region37: #{tpu_custom_call.1} parent=1 // pred_fallthru
      _
    // Predicated region
    $region38: #{tpu_custom_call.1} parent=1 // pred_check
      _
    $region39: #{tpu_custom_call.1} parent=1 // pred_check_branch
      %234 = sbr.rel (0) target = $region41
    $region40: #{tpu_custom_call.1} parent=1 // pred_region
      _
    $region41: #{tpu_custom_call.1} parent=1 // pred_fallthru
      _
    // Predicated region
    $region42: #{tpu_custom_call.1} parent=1 // pred_check
      _
    $region43: #{tpu_custom_call.1} parent=1 // pred_check_branch
      %236 = sbr.rel (0) target = $region45
    $region44: #{tpu_custom_call.1} parent=1 // pred_region
      _
    $region45: #{tpu_custom_call.1} parent=1 // pred_fallthru
      _
    // Predicated region
    $region46: #{tpu_custom_call.1} parent=1 // pred_check
      _
    $region47: #{tpu_custom_call.1} parent=1 // pred_check_branch
      %238 = sbr.rel (0) target = $region49
    $region48: #{tpu_custom_call.1} parent=1 // pred_region
      _
    $region49: #{tpu_custom_call.1} parent=1 // pred_fallthru
      _
    // Predicated region
    $region50: #{tpu_custom_call.1} parent=1 // pred_check
      _
    $region51: #{tpu_custom_call.1} parent=1 // pred_check_branch
      %240 = sbr.rel (0) target = $region53
    $region52: #{tpu_custom_call.1} parent=1 // pred_region
      _
    $region53: #{tpu_custom_call.1} parent=1 // pred_fallthru
      _
    %241 = vsyncpa [#allocation6], 1
    %242 = vsyncpa [#allocation8], 1

</llo_original>
